<compile_context>
chip_gen: v7x
topology: tpu7x:2x2x1
jax: 0.10.0
libtpu: 0.0.40
codegen_flags: <defaults>
</compile_context>

<pallas_src>
import math
import functools

import jax
import jax.numpy as jnp
from jax.experimental import pallas as pl
from jax.experimental.pallas import tpu as pltpu


def _round_up(x, m):
    return ((x + m - 1) // m) * m


def _num_copies(in_ft, out_ft):
    """Smallest weight-replication factor c so c*out_ft is a multiple of 128
    lanes (lane-dense output stores), with a cap on the replicated weight
    footprint.  Falls back to 1 (still correct, just lane-masked stores)."""
    if out_ft % 128 == 0:
        return 1
    for c in range(1, 129):
        if (c * out_ft) % 128 == 0 and c * in_ft <= 1024 and c * out_ft <= 1024:
            return c
    return 1


def _block_diag_weight(w, copies):
    """(in_ft, out_ft) -> (copies*in_ft, copies*out_ft) block-diagonal weight."""
    if copies == 1:
        return w
    in_ft, out_ft = w.shape
    eye = jnp.eye(copies, dtype=w.dtype)
    return jnp.einsum("ij,kl->ikjl", eye, w).reshape(
        copies * in_ft, copies * out_ft)


def _choose_tile(mr, tile_max, align):
    """Pick the row tile (in reshaped rows) for the 1-D grid."""
    if mr <= align:
        return mr                       # single full-extent block
    t = min(tile_max, mr)
    # v7x megacore: keep >= ~8 grid steps when there is enough work so both
    # TensorCores get rows, but never shrink below 512 rows (the ~600-cycle
    # per-step overhead must stay amortized; harmless on 1-TC v5e/v6e).
    per_core = _round_up(pl.cdiv(mr, 8), align)
    t = min(t, max(per_core, 512))
    t = max(align, (t // align) * align)
    return mr if t >= mr else t


def _embed_matmul_kernel(x_ref, w_ref, o_ref, *, x_cast):
    x = x_ref[...]
    if x_cast is not None:
        x = x.astype(x_cast)            # cast in VMEM: no extra HBM traffic
    o_ref[...] = jnp.dot(
        x, w_ref[...], preferred_element_type=jnp.float32).astype(o_ref.dtype)


def embed_matmul(x, weight_big, *, copies, out_ft, tm=32768,
                 compute_dtype=None, out_dtype=None):
    """x @ weight via one Pallas call.

    x:          (Mp, in_ft) with Mp % copies == 0 (pad rows already appended).
    weight_big: (copies*in_ft, copies*out_ft) block-diagonal weight.
    Returns (Mp, out_ft); f32 MXU accumulation, cast to out_dtype on store.
    """
    Mp, in_ft = x.shape
    assert Mp % copies == 0 and Mp > 0
    Kb, Nb = weight_big.shape
    assert Kb == copies * in_ft and Nb == copies * out_ft

    if out_dtype is None:
        out_dtype = jnp.float32
    w = weight_big if compute_dtype is None else weight_big.astype(compute_dtype)

    Mr = Mp // copies
    x_r = x.reshape(Mr, Kb)             # free, row-major reshape

    align = 16                          # safe for f32 and sub-32-bit packing
    out_isize = jnp.dtype(out_dtype).itemsize
    bytes_per_row = 2 * (Kb * x.dtype.itemsize + Nb * out_isize)
    vmem_row_cap = max(align,
                       ((40 << 20) // max(1, bytes_per_row) // align) * align)
    tile = _choose_tile(Mr, min(max(1, tm // copies), vmem_row_cap), align)
    grid = pl.cdiv(Mr, tile)            # ragged last block handled by Pallas

    # Explicit scoped-VMEM budget: double-buffered X + out blocks + weight,
    # plus headroom.  Lifts v5e's 16 MiB default for large tiles while staying
    # well inside every generation's physical VMEM.
    need = (2 * tile * Kb * x.dtype.itemsize
            + 2 * tile * Nb * out_isize
            + 2 * Kb * Nb * jnp.dtype(w.dtype).itemsize)
    vmem_limit = max(16 << 20, min(int(1.3 * need) + (2 << 20), 48 << 20))

    kernel = functools.partial(_embed_matmul_kernel, x_cast=compute_dtype)
    out = pl.pallas_call(
        kernel,
        out_shape=jax.ShapeDtypeStruct((Mr, Nb), out_dtype),
        grid_spec=pltpu.PrefetchScalarGridSpec(
            num_scalar_prefetch=0,
            grid=(grid,),
            in_specs=[
                # Dominant HBM read stream: one large row tile of X.
                pl.BlockSpec((tile, Kb), lambda i: (i, 0)),
                # Constant block index: the small weight stays VMEM-resident.
                pl.BlockSpec((Kb, Nb), lambda i: (0, 0)),
            ],
            out_specs=pl.BlockSpec((tile, Nb), lambda i: (i, 0)),
        ),
        compiler_params=pltpu.CompilerParams(
            dimension_semantics=("parallel",),
            vmem_limit_bytes=vmem_limit,
        ),
    )(x_r, w)
    return out.reshape(Mp, out_ft)      # free reshape back


def _embed_forward(weight_big, parts, *, copies, out_ft, tm,
                   compute_dtype, out_dtype):
    """Pure function (jitted) computing X_part @ weight for every part."""
    in_ft = weight_big.shape[0] // copies
    sizes = [p.shape[0] for p in parts]
    total = sum(sizes)
    pad = (-total) % copies
    pieces = list(parts)
    if pad:
        pieces.append(jnp.zeros((pad, in_ft), dtype=parts[0].dtype))
    x_all = jnp.concatenate(pieces, axis=0)          # single materialization
    y_all = embed_matmul(x_all, weight_big, copies=copies, out_ft=out_ft,
                         tm=tm, compute_dtype=compute_dtype,
                         out_dtype=out_dtype)
    outs, off = [], 0
    for n in sizes:
        outs.append(y_all[off:off + n])              # pad rows never read
        off += n
    return tuple(outs)


class EmbedLayer:
    """JAX/Pallas port of the PyTorch Embed_layer module.

    forward(X) computes X[dty] @ weight for every dty in dty_nets.  All dty
    entries are fused into one pallas_call; the lane-dense block-diagonal
    weight is built once at construction time.
    """

    def __init__(self, in_ft, out_ft, dty_nets, key, *,
                 compute_dtype=None, out_dtype=None, tm=32768):
        stdv = 1.0 / math.sqrt(out_ft)
        # matches nn.init: weight.data.uniform_(-stdv, stdv)
        self.weight = jax.random.uniform(
            key, (in_ft, out_ft), dtype=jnp.float32, minval=-stdv, maxval=stdv)
        self.dty_nets = list(dty_nets)
        self.copies = _num_copies(in_ft, out_ft)
        self.weight_big = _block_diag_weight(self.weight, self.copies)
        self._forward = jax.jit(functools.partial(
            _embed_forward, copies=self.copies, out_ft=out_ft, tm=tm,
            compute_dtype=compute_dtype, out_dtype=out_dtype))

    def __call__(self, X):
        parts = tuple(X[d] for d in self.dty_nets)
        outs = self._forward(self.weight_big, parts)
        return dict(zip(self.dty_nets, outs))


if __name__ == "__main__":
    key = jax.random.PRNGKey(0)
    k_w, k_a, k_b, k_c, k_d, k_e, k_f = jax.random.split(key, 7)

    in_ft, out_ft = 32, 16
    dty_nets = ["lncRNA", "protein", "miRNA"]

    # Small, heterogeneous node counts (not multiples of the replication
    # factor) — exercises the fused pad row handling.
    X = {
        "lncRNA":  jax.random.normal(k_a, (16, in_ft), dtype=jnp.float32),
        "protein": jax.random.normal(k_b, (24, in_ft), dtype=jnp.float32),
        "miRNA":   jax.random.normal(k_c, (9,  in_ft), dtype=jnp.float32),
    }

    # ---- default path: exact f32 end-to-end (matches the PyTorch module) ---
    layer = EmbedLayer(in_ft, out_ft, dty_nets, k_w)
    out = layer(X)
    out = jax.tree_util.tree_map(jax.block_until_ready, out)
    for d in dty_nets:
        ref = X[d] @ layer.weight
        assert out[d].shape == (X[d].shape[0], out_ft), d
        assert jnp.allclose(out[d], ref, atol=1e-5, rtol=1e-5), d

    # ---- multi-block path: small tm forces >1 grid step + ragged last block -
    X2 = {
        "lncRNA":  jax.random.normal(k_d, (40, in_ft), dtype=jnp.float32),
        "protein": jax.random.normal(k_e, (72, in_ft), dtype=jnp.float32),
        "miRNA":   jax.random.normal(k_f, (50, in_ft), dtype=jnp.float32),
    }
    layer2 = EmbedLayer(in_ft, out_ft, dty_nets, k_w, tm=128)
    out2 = layer2(X2)
    out2 = jax.tree_util.tree_map(jax.block_until_ready, out2)
    for d in dty_nets:
        ref = X2[d] @ layer2.weight
        assert jnp.allclose(out2[d], ref, atol=1e-5, rtol=1e-5), d

    # ---- optional fast path: bf16 compute + bf16 output (in-kernel cast) ----
    layer_bf = EmbedLayer(in_ft, out_ft, dty_nets, k_w,
                          compute_dtype=jnp.bfloat16, out_dtype=jnp.bfloat16)
    out_bf = layer_bf(X)
    out_bf = jax.tree_util.tree_map(jax.block_until_ready, out_bf)
    for d in dty_nets:
        ref = X[d] @ layer_bf.weight
        assert jnp.allclose(out_bf[d].astype(jnp.float32), ref,
                            atol=5e-2, rtol=5e-2), d

    print("KERNEL_OK")
</pallas_src>

<mosaic_0001>
module attributes {stable_mosaic.version = 11 : i64} {
  func.func @_embed_matmul_kernel(%arg0: i32, %arg1: memref<7x256xf32, #tpu.memory_space<vmem>>, %arg2: memref<256x128xf32, #tpu.memory_space<vmem>>, %arg3: memref<7x128xf32, #tpu.memory_space<vmem>>) attributes {dimension_semantics = [#tpu.dimension_semantics<parallel>], iteration_bounds = array<i64: 1>, scalar_prefetch = 0 : i64, scratch_operands = 0 : i64, tpu.core_type = #tpu.core_type<tc>, window_params = [{transform_indices = @transform_0, window_bounds = array<i64: 7, 256>}, {pipeline_mode = #tpu.pipeline_mode<synchronous>, transform_indices = @transform_1, window_bounds = array<i64: 256, 128>}, {transform_indices = @transform_2, window_bounds = array<i64: 7, 128>}]} {
    %c0 = arith.constant 0 : index
    %c0_0 = arith.constant 0 : index
    %0 = vector.load %arg1[%c0, %c0_0] : memref<7x256xf32, #tpu.memory_space<vmem>>, vector<7x256xf32>
    %c0_1 = arith.constant 0 : index
    %c0_2 = arith.constant 0 : index
    %1 = vector.load %arg2[%c0_1, %c0_2] : memref<256x128xf32, #tpu.memory_space<vmem>>, vector<256x128xf32>
    %cst = arith.constant dense<0.000000e+00> : vector<7x128xf32>
    %2 = tpu.matmul %0, %1, %cst {dimension_numbers = #tpu.dot_dimension_numbers<[1], [0], [0], [1], [0, 0, 1, 1], [], []>} : vector<7x256xf32>, vector<256x128xf32>, vector<7x128xf32> -> vector<7x128xf32>
    %c0_3 = arith.constant 0 : index
    %c0_4 = arith.constant 0 : index
    %3 = vector.load %arg3[%c0_3, %c0_4] : memref<7x128xf32, #tpu.memory_space<vmem>>, vector<7x128xf32>
    tpu.vector_store %arg3[%c0_3, %c0_4], %2 {strides = array<i32>} : memref<7x128xf32, #tpu.memory_space<vmem>>, vector<7x128xf32>,
    return
  }
  func.func @transform_0(%arg0: i32) -> (i32, i32) {
    %c0_i32 = arith.constant 0 : i32
    %c0_i32_0 = arith.constant 0 : i32
    return %arg0, %c0_i32 : i32, i32
  }
  func.func @transform_1(%arg0: i32) -> (i32, i32) {
    %c0_i32 = arith.constant 0 : i32
    %c0_i32_0 = arith.constant 0 : i32
    %c0_i32_1 = arith.constant 0 : i32
    return %c0_i32, %c0_i32_0 : i32, i32
  }
  func.func @transform_2(%arg0: i32) -> (i32, i32) {
    %c0_i32 = arith.constant 0 : i32
    %c0_i32_0 = arith.constant 0 : i32
    return %arg0, %c0_i32 : i32, i32
  }
}

</mosaic_0001>

<llo_original>
// kernel: _embed_forward.1
$region0: #{_embed_forward.1}
  #allocation0 [shape = 'u32[]', space=smem, size = 0x4, offset = 0x4, fixed_abs, tag = 'smem constant byte address 0x4 - core index']
  #allocation1 [shape = 'u32[144,128]{1,0:T(1,128)}', space=vmem, size = 0x12000, scoped, tag = 'internal scratch']
  %s0 = inlined_call_operand.vmem [shape: f32[7,256], index: 0, kind: input, shape index: {}]
  %s1 = inlined_call_operand.hbm [shape: f32[256,128], index: 1, kind: input, shape index: {}]
  %s2 = inlined_call_operand.vmem [shape: f32[7,128], index: 2, kind: output, shape index: {}]
  %s3 = sld [smem:[#allocation0]]
  $region22: #{_embed_forward.1} parent=0
    _
  %s5 = ssub.s32 1, %s3
  %s6 = scalar_select 0, %s5, %s3
  $region1: #{_embed_forward.1} parent=0
    #allocation2 [shape = 'u8[131072]{0}', space=vmem, size = 0x20000, scoped, tag = 'input window, operand 1, single buffered']
    #allocation3 [shape = 's32[1]{0}', space=sflag, size = 0x4, scoped, tag = 'scoped memory for _embed_forward.1']
    %7 = vsyncpa [#allocation3], 0
    // Predicated region
    $region2: #{_embed_forward.1} parent=1 // pred_check
      _
    $region3: #{_embed_forward.1} parent=1 // pred_check_branch
      %9 = sbr.rel (0) target = $region5
    $region4: #{_embed_forward.1} parent=1 // pred_region
      _
    $region5: #{_embed_forward.1} parent=1 // pred_fallthru
      _
    // Predicated region
    $region6: #{_embed_forward.1} parent=1 // pred_check
      _
    $region7: #{_embed_forward.1} parent=1 // pred_check_branch
      %11 = sbr.rel (0) target = $region9
    $region8: #{_embed_forward.1} parent=1 // pred_region
      %s13 = ssub.s32 4096, 4096
      %14 = vsyncadd [#allocation3], %s13
      %s15 = sshll.u32 [#allocation2], 4
      %s16 = int_to_ptr.vmem [resolvable:$true] %s15
      %21 = dma.hbm_to_vmem [thread:$0]  %s1, 4096, %s16, [#allocation3], 128, 128, 8
    $region9: #{_embed_forward.1} parent=1 // pred_fallthru
      _
    // Predicated region
    $region10: #{_embed_forward.1} parent=1 // pred_check
      _
    $region11: #{_embed_forward.1} parent=1 // pred_check_branch
      %23 = sbr.rel (0) target = $region13
    $region12: #{_embed_forward.1} parent=1 // pred_region
      %24 = dma.done [#allocation3], 4096
    $region13: #{_embed_forward.1} parent=1 // pred_fallthru
      _
    %v25 = vld [vmem:[%s0] sm:$0x7f]
    %v26 = vld [vmem:[%s0 + $0x8] sm:$0x7f]
    %v27 = vld [vmem:[#allocation2] sm:$0xff]
    %v28 = vld [vmem:[#allocation2 + $0x8] sm:$0xff]
    %v29 = vld [vmem:[#allocation2 + $0x10] sm:$0xff]
    %v30 = vld [vmem:[#allocation2 + $0x18] sm:$0xff]
    %v31 = vld [vmem:[#allocation2 + $0x20] sm:$0xff]
    %v32 = vld [vmem:[#allocation2 + $0x28] sm:$0xff]
    %v33 = vld [vmem:[#allocation2 + $0x30] sm:$0xff]
    %v34 = vld [vmem:[#allocation2 + $0x38] sm:$0xff]
    %v35 = vld [vmem:[#allocation2 + $0x40] sm:$0xff]
    %v36 = vld [vmem:[#allocation2 + $0x48] sm:$0xff]
    %v37 = vld [vmem:[#allocation2 + $0x50] sm:$0xff]
    %v38 = vld [vmem:[#allocation2 + $0x58] sm:$0xff]
    %v39 = vld [vmem:[#allocation2 + $0x60] sm:$0xff]
    %v40 = vld [vmem:[#allocation2 + $0x68] sm:$0xff]
    %v41 = vld [vmem:[#allocation2 + $0x70] sm:$0xff]
    %v42 = vld [vmem:[#allocation2 + $0x78] sm:$0xff]
    %v43 = vld [vmem:[#allocation2 + $0x80] sm:$0xff]
    %v44 = vld [vmem:[#allocation2 + $0x88] sm:$0xff]
    %v45 = vld [vmem:[#allocation2 + $0x90] sm:$0xff]
    %v46 = vld [vmem:[#allocation2 + $0x98] sm:$0xff]
    %v47 = vld [vmem:[#allocation2 + $0xa0] sm:$0xff]
    %v48 = vld [vmem:[#allocation2 + $0xa8] sm:$0xff]
    %v49 = vld [vmem:[#allocation2 + $0xb0] sm:$0xff]
    %v50 = vld [vmem:[#allocation2 + $0xb8] sm:$0xff]
    %v51 = vld [vmem:[#allocation2 + $0xc0] sm:$0xff]
    %v52 = vld [vmem:[#allocation2 + $0xc8] sm:$0xff]
    %v53 = vld [vmem:[#allocation2 + $0xd0] sm:$0xff]
    %v54 = vld [vmem:[#allocation2 + $0xd8] sm:$0xff]
    %v55 = vld [vmem:[#allocation2 + $0xe0] sm:$0xff]
    %v56 = vld [vmem:[#allocation2 + $0xe8] sm:$0xff]
    %v57 = vld [vmem:[#allocation2 + $0xf0] sm:$0xff]
    %v58 = vld [vmem:[#allocation2 + $0xf8] sm:$0xff]
    %59 = vmatprep.subr.mxu0 0.0
    %60 = vmatpush1.msra.mxu0 %v27
    %61 = vmatprep.subr.mxu0 0.0
    %62 = vmatpush1.msra.mxu0 %v28
    %63 = vmatprep.subr.mxu0 0.0
    %64 = vmatpush1.msra.mxu0 %v29
    %65 = vmatprep.subr.mxu0 0.0
    %66 = vmatpush1.msra.mxu0 %v30
    %67 = vmatprep.subr.mxu0 0.0
    %68 = vmatpush1.msra.mxu0 %v31
    %69 = vmatprep.subr.mxu0 0.0
    %70 = vmatpush1.msra.mxu0 %v32
    %71 = vmatprep.subr.mxu0 0.0
    %72 = vmatpush1.msra.mxu0 %v33
    %73 = vmatprep.subr.mxu0 0.0
    %74 = vmatpush1.msra.mxu0 %v34
    %75 = vmatprep.subr.mxu0 0.0
    %76 = vmatpush1.msra.mxu0 %v35
    %77 = vmatprep.subr.mxu0 0.0
    %78 = vmatpush1.msra.mxu0 %v36
    %79 = vmatprep.subr.mxu0 0.0
    %80 = vmatpush1.msra.mxu0 %v37
    %81 = vmatprep.subr.mxu0 0.0
    %82 = vmatpush1.msra.mxu0 %v38
    %83 = vmatprep.subr.mxu0 0.0
    %84 = vmatpush1.msra.mxu0 %v39
    %85 = vmatprep.subr.mxu0 0.0
    %86 = vmatpush1.msra.mxu0 %v40
    %87 = vmatprep.subr.mxu0 0.0
    %88 = vmatpush1.msra.mxu0 %v41
    %89 = vmatprep.subr.mxu0 0.0
    %90 = vmatpush1.msra.mxu0 %v42
    %91 = vmatprep.subr.mxu0 0.0
    %92 = vmatpush1.msra.mxu0 %v43
    %93 = vmatprep.subr.mxu0 0.0
    %94 = vmatpush1.msra.mxu0 %v44
    %95 = vmatprep.subr.mxu0 0.0
    %96 = vmatpush1.msra.mxu0 %v45
    %97 = vmatprep.subr.mxu0 0.0
    %98 = vmatpush1.msra.mxu0 %v46
    %99 = vmatprep.subr.mxu0 0.0
    %100 = vmatpush1.msra.mxu0 %v47
    %101 = vmatprep.subr.mxu0 0.0
    %102 = vmatpush1.msra.mxu0 %v48
    %103 = vmatprep.subr.mxu0 0.0
    %104 = vmatpush1.msra.mxu0 %v49
    %105 = vmatprep.subr.mxu0 0.0
    %106 = vmatpush1.msra.mxu0 %v50
    %107 = vmatprep.subr.mxu0 0.0
    %108 = vmatpush1.msra.mxu0 %v51
    %109 = vmatprep.subr.mxu0 0.0
    %110 = vmatpush1.msra.mxu0 %v52
    %111 = vmatprep.subr.mxu0 0.0
    %112 = vmatpush1.msra.mxu0 %v53
    %113 = vmatprep.subr.mxu0 0.0
    %114 = vmatpush1.msra.mxu0 %v54
    %115 = vmatprep.subr.mxu0 0.0
    %116 = vmatpush1.msra.mxu0 %v55
    %117 = vmatprep.subr.mxu0 0.0
    %118 = vmatpush1.msra.mxu0 %v56
    %119 = vmatprep.subr.mxu0 0.0
    %120 = vmatpush1.msra.mxu0 %v57
    %121 = vmatprep.subr.mxu0 0.0
    %122 = vmatpush1.msra.mxu0 %v58
    %123 = vmatprep.mubr.f32.mxu0 %v26
    %124 = vmatmul.mubr.f32.gmra.mrb[0].mxu0 %v25
    %v125 = vpop.f32.mrb[0].mxu0
    %v126 = vadd.f32 0.0, %v125
    %v127 = vpop.f32.mrb[0].mxu0
    %128 = vdwg.mxu0
    %129 = vst [vmem:[%s2] sm:$0x7f] %v126
    // Predicated region
    $region14: #{_embed_forward.1} parent=1 // pred_check
      _
    $region15: #{_embed_forward.1} parent=1 // pred_check_branch
      %131 = sbr.rel (0) target = $region17
    $region16: #{_embed_forward.1} parent=1 // pred_region
      _
    $region17: #{_embed_forward.1} parent=1 // pred_fallthru
      _
    // Predicated region
    $region18: #{_embed_forward.1} parent=1 // pred_check
      _
    $region19: #{_embed_forward.1} parent=1 // pred_check_branch
      %133 = sbr.rel (0) target = $region21
    $region20: #{_embed_forward.1} parent=1 // pred_region
      _
    $region21: #{_embed_forward.1} parent=1 // pred_fallthru
      _
    %134 = vsyncpa [#allocation3], 1

</llo_original>
